<compile_context>
chip_gen: v6e
topology: v6e:2x2x1
jax: 0.10.0
libtpu: 0.0.40
codegen_flags: <defaults>
</compile_context>

<pallas_src>
import jax
import jax.numpy as jnp
from jax import lax
from jax.experimental import pallas as pl
from jax.experimental.pallas import tpu as pltpu

H = W = 256
KC = 4                      # conv kernel size
POOL = 8                    # maxpool kernel / stride
P_OUT = 31                  # pooled spatial size: floor((256 - 3) / 8)
CONV_USED = P_OUT * POOL    # 248: conv rows/cols actually consumed by the pool
LW_ROWS = P_OUT + 1         # 32: sublane-padded row-pool / weight buffers
OUT_W = 128                 # lane-dense per-image output row
B_TILE_MAX = 8              # images per grid step (2 x 8 x 256 KiB = 4 MiB dbl-buffered)


def ndvi_kernel(x_ref, cw_ref, cb_ref, lw_ref, lb_ref, out_ref, rowpool_ref):
    # x_ref:       (b_tile, 256, 256) f32 VMEM  (channel dim squeezed by BlockSpec)
    # cw_ref:      (16,) f32 SMEM   conv weight, row-major 4x4
    # cb_ref:      (1,)  f32 SMEM   conv bias
    # lw_ref:      (32, 256) f32 VMEM  lane-dense linear weight (row 31 zero)
    # lb_ref:      (1,)  f32 SMEM   linear bias
    # out_ref:     (b_tile, 128) f32 VMEM  one broadcast row per image
    # rowpool_ref: (32, 256) f32 VMEM scratch (row-pooled conv, re-used per image)
    b_tile = x_ref.shape[0]

    # Hoist all SMEM scalar reads out of the loops.
    wk = [cw_ref[k] for k in range(KC * KC)]
    cb = cb_ref[0]
    lb = lb_ref[0]

    # Row 31 of the row-pool buffer is never written below; clear the buffer so
    # the zero weight row can never multiply stale VMEM garbage (NaN * 0 = NaN).
    rowpool_ref[...] = jnp.zeros((LW_ROWS, W), jnp.float32)

    def one_image(n, carry):
        # ---- Conv2d(1,1,4) + row max-pool, strip-mined over the 31 pool rows ----
        def one_strip(r, c):
            row0 = pl.multiple_of(r * POOL, POOL)
            # Aligned 16-row slab covers the 11 input rows this strip needs.
            slab = x_ref[n, pl.ds(row0, 2 * POOL), :]                # (16, 256)
            acc = jnp.zeros((POOL, W), jnp.float32)
            for di in range(KC):                                     # static
                rows = slab[di:di + POOL, :]                         # (8, 256)
                for dj in range(KC):                                 # static
                    # shifted[:, j] = rows[:, j + dj]; wrap only hits lanes >= 253,
                    # which never reach a nonzero weight.
                    sh = rows if dj == 0 else pltpu.roll(rows, shift=W - dj, axis=1)
                    acc = acc + sh * wk[di * KC + dj]
            # Max over the 8 conv rows of this pool row, plus the conv bias.
            rowvals = jnp.max(acc, axis=0, keepdims=True) + cb       # (1, 256)
            rowpool_ref[pl.ds(r, 1), :] = rowvals
            return c

        lax.fori_loop(0, P_OUT, one_strip, 0)

        # ---- Column max-pool: 3-step lane roll tree (stays 256-lane dense) ----
        m = rowpool_ref[...]                                         # (32, 256)
        m = jnp.maximum(m, pltpu.roll(m, shift=W - 1, axis=1))
        m = jnp.maximum(m, pltpu.roll(m, shift=W - 2, axis=1))
        m = jnp.maximum(m, pltpu.roll(m, shift=W - 4, axis=1))
        # lane 8*q of row r now holds pooled[r, q]; every other lane (and the
        # wrapped columns >= 248, and padding row 31) meets a zero weight below.

        # ---- Linear(961 -> 1): lane-dense multiply + full reduce ----
        v = jnp.sum(m * lw_ref[...], keepdims=True) + lb             # (1, 1)
        out_ref[pl.ds(n, 1), :] = jnp.broadcast_to(v, (1, OUT_W))
        return carry

    lax.fori_loop(0, b_tile, one_image, 0)


@jax.jit
def ndvi_forward(x, conv_w, conv_b, lin_w, lin_b):
    """x: (B, 1, 256, 256) f32; returns (B, 1) f32 like the PyTorch module."""
    B = x.shape[0]
    b_tile = min(B_TILE_MAX, B)
    g = pl.cdiv(B, b_tile)
    b_pad = g * b_tile
    if b_pad != B:
        x = jnp.pad(x, ((0, b_pad - B), (0, 0), (0, 0), (0, 0)))

    cw = conv_w.reshape(KC * KC).astype(jnp.float32)
    cb = conv_b.reshape(1).astype(jnp.float32)
    lb = lin_b.reshape(1).astype(jnp.float32)

    # Pre-expand the linear weight to a lane-dense (32, 256) tile:
    # lw_exp[r, 8*q] = lin_w[0, r*31 + q], zeros elsewhere (incl. padding row 31).
    lw2 = lin_w.reshape(P_OUT, P_OUT).astype(jnp.float32)
    lw_exp = jnp.zeros((LW_ROWS, W), jnp.float32)
    lw_exp = lw_exp.at[:P_OUT, 0:CONV_USED:POOL].set(lw2)

    out = pl.pallas_call(
        ndvi_kernel,
        out_shape=jax.ShapeDtypeStruct((b_pad, OUT_W), jnp.float32),
        grid=(g,),
        in_specs=[
            pl.BlockSpec((b_tile, None, H, W), lambda i: (i, 0, 0, 0)),   # images
            pl.BlockSpec(memory_space=pltpu.MemorySpace.SMEM),            # conv weight (16,)
            pl.BlockSpec(memory_space=pltpu.MemorySpace.SMEM),            # conv bias (1,)
            pl.BlockSpec((LW_ROWS, W), lambda i: (0, 0)),                 # linear weight (32,256)
            pl.BlockSpec(memory_space=pltpu.MemorySpace.SMEM),            # linear bias (1,)
        ],
        out_specs=pl.BlockSpec((b_tile, OUT_W), lambda i: (i, 0)),
        scratch_shapes=[pltpu.VMEM((LW_ROWS, W), jnp.float32)],
        compiler_params=pltpu.CompilerParams(
            dimension_semantics=("parallel",)),
    )(x, cw, cb, lw_exp, lb)
    return out[:B, :1]


def ref_forward(x, conv_w, conv_b, lin_w, lin_b):
    """Pure-JAX reference matching the PyTorch forward exactly."""
    B = x.shape[0]
    xs = x[:, 0]
    cw = conv_w.reshape(KC, KC)
    Hc = H - KC + 1
    conv = jnp.zeros((B, Hc, Hc), jnp.float32)
    for di in range(KC):
        for dj in range(KC):
            conv = conv + xs[:, di:di + Hc, dj:dj + Hc] * cw[di, dj]
    conv = conv + conv_b[0]
    pooled = conv[:, :CONV_USED, :CONV_USED].reshape(
        B, P_OUT, POOL, P_OUT, POOL).max(axis=(2, 4))
    flat = pooled.reshape(B, -1)
    return flat @ lin_w.T + lin_b


if __name__ == "__main__":
    key = jax.random.PRNGKey(0)
    k_x, k_cw, k_cb, k_lw, k_lb = jax.random.split(key, 5)

    B = 2
    x = jax.random.normal(k_x, (B, 1, H, W), dtype=jnp.float32)

    # Deterministic parameter init (PyTorch-style uniform bounds).
    conv_bound = 1.0 / (1 * KC * KC) ** 0.5
    lin_bound = 1.0 / (961.0 ** 0.5)
    conv_w = jax.random.uniform(k_cw, (1, 1, KC, KC), jnp.float32,
                                -conv_bound, conv_bound)
    conv_b = jax.random.uniform(k_cb, (1,), jnp.float32, -conv_bound, conv_bound)
    lin_w = jax.random.uniform(k_lw, (1, 961), jnp.float32, -lin_bound, lin_bound)
    lin_b = jax.random.uniform(k_lb, (1,), jnp.float32, -lin_bound, lin_bound)

    out = ndvi_forward(x, conv_w, conv_b, lin_w, lin_b)
    out = jax.block_until_ready(out)

    ref = ref_forward(x, conv_w, conv_b, lin_w, lin_b)
    assert out.shape == (B, 1), out.shape
    assert jnp.allclose(out, ref, rtol=1e-4, atol=1e-4), (out, ref)
    print("KERNEL_OK")
</pallas_src>

<mosaic_0001>
module attributes {stable_mosaic.version = 11 : i64} {
  func.func @ndvi_kernel(%arg0: i32, %arg1: memref<2x1x256x256xf32, #tpu.memory_space<vmem>>, %arg2: memref<16xf32, #tpu.memory_space<smem>>, %arg3: memref<1xf32, #tpu.memory_space<smem>>, %arg4: memref<32x256xf32, #tpu.memory_space<vmem>>, %arg5: memref<1xf32, #tpu.memory_space<smem>>, %arg6: memref<2x128xf32, #tpu.memory_space<vmem>>, %arg7: memref<32x256xf32, #tpu.memory_space<vmem>>) attributes {dimension_semantics = [#tpu.dimension_semantics<parallel>], iteration_bounds = array<i64: 1>, scalar_prefetch = 0 : i64, scratch_operands = 1 : i64, tpu.core_type = #tpu.core_type<tc>, window_params = [{transform_indices = @transform_0, window_bounds = array<i64: 2, 1, 256, 256>}, {transform_indices = @transform_1, window_bounds = array<i64: 16>}, {transform_indices = @transform_2, window_bounds = array<i64: 1>}, {pipeline_mode = #tpu.pipeline_mode<synchronous>, transform_indices = @transform_3, window_bounds = array<i64: 32, 256>}, {transform_indices = @transform_4, window_bounds = array<i64: 1>}, {transform_indices = @transform_5, window_bounds = array<i64: 2, 128>}]} {
    %c0 = arith.constant 0 : index
    %0 = memref.load %arg2[%c0] : memref<16xf32, #tpu.memory_space<smem>>
    %c1 = arith.constant 1 : index
    %1 = memref.load %arg2[%c1] : memref<16xf32, #tpu.memory_space<smem>>
    %c2 = arith.constant 2 : index
    %2 = memref.load %arg2[%c2] : memref<16xf32, #tpu.memory_space<smem>>
    %c3 = arith.constant 3 : index
    %3 = memref.load %arg2[%c3] : memref<16xf32, #tpu.memory_space<smem>>
    %c4 = arith.constant 4 : index
    %4 = memref.load %arg2[%c4] : memref<16xf32, #tpu.memory_space<smem>>
    %c5 = arith.constant 5 : index
    %5 = memref.load %arg2[%c5] : memref<16xf32, #tpu.memory_space<smem>>
    %c6 = arith.constant 6 : index
    %6 = memref.load %arg2[%c6] : memref<16xf32, #tpu.memory_space<smem>>
    %c7 = arith.constant 7 : index
    %7 = memref.load %arg2[%c7] : memref<16xf32, #tpu.memory_space<smem>>
    %c8 = arith.constant 8 : index
    %8 = memref.load %arg2[%c8] : memref<16xf32, #tpu.memory_space<smem>>
    %c9 = arith.constant 9 : index
    %9 = memref.load %arg2[%c9] : memref<16xf32, #tpu.memory_space<smem>>
    %c10 = arith.constant 10 : index
    %10 = memref.load %arg2[%c10] : memref<16xf32, #tpu.memory_space<smem>>
    %c11 = arith.constant 11 : index
    %11 = memref.load %arg2[%c11] : memref<16xf32, #tpu.memory_space<smem>>
    %c12 = arith.constant 12 : index
    %12 = memref.load %arg2[%c12] : memref<16xf32, #tpu.memory_space<smem>>
    %c13 = arith.constant 13 : index
    %13 = memref.load %arg2[%c13] : memref<16xf32, #tpu.memory_space<smem>>
    %c14 = arith.constant 14 : index
    %14 = memref.load %arg2[%c14] : memref<16xf32, #tpu.memory_space<smem>>
    %c15 = arith.constant 15 : index
    %15 = memref.load %arg2[%c15] : memref<16xf32, #tpu.memory_space<smem>>
    %c0_0 = arith.constant 0 : index
    %16 = memref.load %arg3[%c0_0] : memref<1xf32, #tpu.memory_space<smem>>
    %c0_1 = arith.constant 0 : index
    %17 = memref.load %arg5[%c0_1] : memref<1xf32, #tpu.memory_space<smem>>
    %cst = arith.constant 0.000000e+00 : f32
    %18 = vector.broadcast %cst : f32 to vector<32x256xf32>
    %c0_2 = arith.constant 0 : index
    %c0_3 = arith.constant 0 : index
    %19 = vector.load %arg7[%c0_2, %c0_3] : memref<32x256xf32, #tpu.memory_space<vmem>>, vector<32x256xf32>
    tpu.vector_store %arg7[%c0_2, %c0_3], %18 {strides = array<i32>} : memref<32x256xf32, #tpu.memory_space<vmem>>, vector<32x256xf32>,
    %c0_i32 = arith.constant 0 : i32
    %c2_i32 = arith.constant 2 : i32
    %20 = arith.addi %c0_i32, %c2_i32 : i32
    %c1_i32 = arith.constant 1 : i32
    scf.for %arg8 = %c0_i32 to %20 step %c1_i32  : i32 {
      %c0_i32_5 = arith.constant 0 : i32
      %c31_i32 = arith.constant 31 : i32
      %21 = arith.addi %c0_i32_5, %c31_i32 : i32
      %c1_i32_6 = arith.constant 1 : i32
      scf.for %arg9 = %c0_i32_5 to %21 step %c1_i32_6  : i32 {
        %c8_i32 = arith.constant 8 : i32
        %42 = arith.muli %arg9, %c8_i32 : i32
        %43 = tpu.assume_multiple %42, 8 : i32
        %44 = arith.index_cast %arg8 : i32 to index
        %c0_14 = arith.constant 0 : index
        %45 = arith.index_cast %43 : i32 to index
        %c0_15 = arith.constant 0 : index
        %46 = vector.load %arg1[%44, %c0_14, %45, %c0_15] : memref<2x1x256x256xf32, #tpu.memory_space<vmem>>, vector<1x1x16x256xf32>
        %47 = vector.shape_cast %46 : vector<1x1x16x256xf32> to vector<16x256xf32>
        %cst_16 = arith.constant 0.000000e+00 : f32
        %48 = vector.broadcast %cst_16 : f32 to vector<8x256xf32>
        %49 = vector.extract_strided_slice %47 {offsets = [0, 0], sizes = [8, 256], strides = [1, 1]} : vector<16x256xf32> to vector<8x256xf32>
        %50 = vector.broadcast %0 : f32 to vector<8x256xf32>
        %51 = arith.mulf %49, %50 : vector<8x256xf32>
        %52 = arith.addf %48, %51 : vector<8x256xf32>
        %c255_i32_17 = arith.constant 255 : i32
        %53 = tpu.dynamic_rotate %49 by %c255_i32_17 dim 1 : vector<8x256xf32>, i32 -> vector<8x256xf32>
        %54 = vector.broadcast %1 : f32 to vector<8x256xf32>
        %55 = arith.mulf %53, %54 : vector<8x256xf32>
        %56 = arith.addf %52, %55 : vector<8x256xf32>
        %c254_i32_18 = arith.constant 254 : i32
        %57 = tpu.dynamic_rotate %49 by %c254_i32_18 dim 1 : vector<8x256xf32>, i32 -> vector<8x256xf32>
        %58 = vector.broadcast %2 : f32 to vector<8x256xf32>
        %59 = arith.mulf %57, %58 : vector<8x256xf32>
        %60 = arith.addf %56, %59 : vector<8x256xf32>
        %c253_i32 = arith.constant 253 : i32
        %61 = tpu.dynamic_rotate %49 by %c253_i32 dim 1 : vector<8x256xf32>, i32 -> vector<8x256xf32>
        %62 = vector.broadcast %3 : f32 to vector<8x256xf32>
        %63 = arith.mulf %61, %62 : vector<8x256xf32>
        %64 = arith.addf %60, %63 : vector<8x256xf32>
        %65 = vector.extract_strided_slice %47 {offsets = [1, 0], sizes = [8, 256], strides = [1, 1]} : vector<16x256xf32> to vector<8x256xf32>
        %66 = vector.broadcast %4 : f32 to vector<8x256xf32>
        %67 = arith.mulf %65, %66 : vector<8x256xf32>
        %68 = arith.addf %64, %67 : vector<8x256xf32>
        %c255_i32_19 = arith.constant 255 : i32
        %69 = tpu.dynamic_rotate %65 by %c255_i32_19 dim 1 : vector<8x256xf32>, i32 -> vector<8x256xf32>
        %70 = vector.broadcast %5 : f32 to vector<8x256xf32>
        %71 = arith.mulf %69, %70 : vector<8x256xf32>
        %72 = arith.addf %68, %71 : vector<8x256xf32>
        %c254_i32_20 = arith.constant 254 : i32
        %73 = tpu.dynamic_rotate %65 by %c254_i32_20 dim 1 : vector<8x256xf32>, i32 -> vector<8x256xf32>
        %74 = vector.broadcast %6 : f32 to vector<8x256xf32>
        %75 = arith.mulf %73, %74 : vector<8x256xf32>
        %76 = arith.addf %72, %75 : vector<8x256xf32>
        %c253_i32_21 = arith.constant 253 : i32
        %77 = tpu.dynamic_rotate %65 by %c253_i32_21 dim 1 : vector<8x256xf32>, i32 -> vector<8x256xf32>
        %78 = vector.broadcast %7 : f32 to vector<8x256xf32>
        %79 = arith.mulf %77, %78 : vector<8x256xf32>
        %80 = arith.addf %76, %79 : vector<8x256xf32>
        %81 = vector.extract_strided_slice %47 {offsets = [2, 0], sizes = [8, 256], strides = [1, 1]} : vector<16x256xf32> to vector<8x256xf32>
        %82 = vector.broadcast %8 : f32 to vector<8x256xf32>
        %83 = arith.mulf %81, %82 : vector<8x256xf32>
        %84 = arith.addf %80, %83 : vector<8x256xf32>
        %c255_i32_22 = arith.constant 255 : i32
        %85 = tpu.dynamic_rotate %81 by %c255_i32_22 dim 1 : vector<8x256xf32>, i32 -> vector<8x256xf32>
        %86 = vector.broadcast %9 : f32 to vector<8x256xf32>
        %87 = arith.mulf %85, %86 : vector<8x256xf32>
        %88 = arith.addf %84, %87 : vector<8x256xf32>
        %c254_i32_23 = arith.constant 254 : i32
        %89 = tpu.dynamic_rotate %81 by %c254_i32_23 dim 1 : vector<8x256xf32>, i32 -> vector<8x256xf32>
        %90 = vector.broadcast %10 : f32 to vector<8x256xf32>
        %91 = arith.mulf %89, %90 : vector<8x256xf32>
        %92 = arith.addf %88, %91 : vector<8x256xf32>
        %c253_i32_24 = arith.constant 253 : i32
        %93 = tpu.dynamic_rotate %81 by %c253_i32_24 dim 1 : vector<8x256xf32>, i32 -> vector<8x256xf32>
        %94 = vector.broadcast %11 : f32 to vector<8x256xf32>
        %95 = arith.mulf %93, %94 : vector<8x256xf32>
        %96 = arith.addf %92, %95 : vector<8x256xf32>
        %97 = vector.extract_strided_slice %47 {offsets = [3, 0], sizes = [8, 256], strides = [1, 1]} : vector<16x256xf32> to vector<8x256xf32>
        %98 = vector.broadcast %12 : f32 to vector<8x256xf32>
        %99 = arith.mulf %97, %98 : vector<8x256xf32>
        %100 = arith.addf %96, %99 : vector<8x256xf32>
        %c255_i32_25 = arith.constant 255 : i32
        %101 = tpu.dynamic_rotate %97 by %c255_i32_25 dim 1 : vector<8x256xf32>, i32 -> vector<8x256xf32>
        %102 = vector.broadcast %13 : f32 to vector<8x256xf32>
        %103 = arith.mulf %101, %102 : vector<8x256xf32>
        %104 = arith.addf %100, %103 : vector<8x256xf32>
        %c254_i32_26 = arith.constant 254 : i32
        %105 = tpu.dynamic_rotate %97 by %c254_i32_26 dim 1 : vector<8x256xf32>, i32 -> vector<8x256xf32>
        %106 = vector.broadcast %14 : f32 to vector<8x256xf32>
        %107 = arith.mulf %105, %106 : vector<8x256xf32>
        %108 = arith.addf %104, %107 : vector<8x256xf32>
        %c253_i32_27 = arith.constant 253 : i32
        %109 = tpu.dynamic_rotate %97 by %c253_i32_27 dim 1 : vector<8x256xf32>, i32 -> vector<8x256xf32>
        %110 = vector.broadcast %15 : f32 to vector<8x256xf32>
        %111 = arith.mulf %109, %110 : vector<8x256xf32>
        %112 = arith.addf %108, %111 : vector<8x256xf32>
        %cst_28 = arith.constant dense<0xFF800000> : vector<256xf32>
        %113 = vector.multi_reduction <maximumf>, %112, %cst_28 [0] : vector<8x256xf32> to vector<256xf32>
        %114 = vector.shape_cast %113 : vector<256xf32> to vector<1x256xf32>
        %115 = vector.broadcast %16 : f32 to vector<1x256xf32>
        %116 = arith.addf %114, %115 : vector<1x256xf32>
        %117 = arith.index_cast %arg9 : i32 to index
        %c0_29 = arith.constant 0 : index
        %118 = vector.load %arg7[%117, %c0_29] : memref<32x256xf32, #tpu.memory_space<vmem>>, vector<1x256xf32>
        tpu.vector_store %arg7[%117, %c0_29], %116 {strides = array<i32>} : memref<32x256xf32, #tpu.memory_space<vmem>>, vector<1x256xf32>,
      }
      %c31_i32_7 = arith.constant 31 : i32
      %c0_8 = arith.constant 0 : index
      %c0_9 = arith.constant 0 : index
      %22 = vector.load %arg7[%c0_8, %c0_9] : memref<32x256xf32, #tpu.memory_space<vmem>>, vector<32x256xf32>
      %c255_i32 = arith.constant 255 : i32
      %23 = tpu.dynamic_rotate %22 by %c255_i32 dim 1 : vector<32x256xf32>, i32 -> vector<32x256xf32>
      %24 = arith.maximumf %22, %23 : vector<32x256xf32>
      %c254_i32 = arith.constant 254 : i32
      %25 = tpu.dynamic_rotate %24 by %c254_i32 dim 1 : vector<32x256xf32>, i32 -> vector<32x256xf32>
      %26 = arith.maximumf %24, %25 : vector<32x256xf32>
      %c252_i32 = arith.constant 252 : i32
      %27 = tpu.dynamic_rotate %26 by %c252_i32 dim 1 : vector<32x256xf32>, i32 -> vector<32x256xf32>
      %28 = arith.maximumf %26, %27 : vector<32x256xf32>
      %c0_10 = arith.constant 0 : index
      %c0_11 = arith.constant 0 : index
      %29 = vector.load %arg4[%c0_10, %c0_11] : memref<32x256xf32, #tpu.memory_space<vmem>>, vector<32x256xf32>
      %30 = arith.mulf %28, %29 : vector<32x256xf32>
      %31 = vector.shape_cast %30 : vector<32x256xf32> to vector<1x32x256xf32>
      %cst_12 = arith.constant dense<0.000000e+00> : vector<1xf32>
      %32 = vector.multi_reduction <add>, %31, %cst_12 [1, 2] : vector<1x32x256xf32> to vector<1xf32>
      %33 = vector.shape_cast %32 : vector<1xf32> to vector<1x1x1xf32>
      %34 = vector.extract %33[0, 0, 0] : f32 from vector<1x1x1xf32>
      %35 = vector.broadcast %34 : f32 to vector<1x1xf32>
      %36 = vector.broadcast %17 : f32 to vector<1x1xf32>
      %37 = arith.addf %35, %36 : vector<1x1xf32>
      %38 = vector.shape_cast %37 : vector<1x1xf32> to vector<1x1xf32>
      %39 = vector.broadcast %38 : vector<1x1xf32> to vector<1x128xf32>
      %40 = arith.index_cast %arg8 : i32 to index
      %c0_13 = arith.constant 0 : index
      %41 = vector.load %arg6[%40, %c0_13] : memref<2x128xf32, #tpu.memory_space<vmem>>, vector<1x128xf32>
      tpu.vector_store %arg6[%40, %c0_13], %39 {strides = array<i32>} : memref<2x128xf32, #tpu.memory_space<vmem>>, vector<1x128xf32>,
    }
    %c2_i32_4 = arith.constant 2 : i32
    return
  }
  func.func @transform_0(%arg0: i32) -> (i32, i32, i32, i32) {
    %c0_i32 = arith.constant 0 : i32
    %c0_i32_0 = arith.constant 0 : i32
    %c0_i32_1 = arith.constant 0 : i32
    %c0_i32_2 = arith.constant 0 : i32
    return %arg0, %c0_i32, %c0_i32_0, %c0_i32_1 : i32, i32, i32, i32
  }
  func.func @transform_1(%arg0: i32) -> i32 {
    %c0_i32 = arith.constant 0 : i32
    %c0_i32_0 = arith.constant 0 : i32
    return %c0_i32 : i32
  }
  func.func @transform_2(%arg0: i32) -> i32 {
    %c0_i32 = arith.constant 0 : i32
    %c0_i32_0 = arith.constant 0 : i32
    return %c0_i32 : i32
  }
  func.func @transform_3(%arg0: i32) -> (i32, i32) {
    %c0_i32 = arith.constant 0 : i32
    %c0_i32_0 = arith.constant 0 : i32
    %c0_i32_1 = arith.constant 0 : i32
    return %c0_i32, %c0_i32_0 : i32, i32
  }
  func.func @transform_4(%arg0: i32) -> i32 {
    %c0_i32 = arith.constant 0 : i32
    %c0_i32_0 = arith.constant 0 : i32
    return %c0_i32 : i32
  }
  func.func @transform_5(%arg0: i32) -> (i32, i32) {
    %c0_i32 = arith.constant 0 : i32
    %c0_i32_0 = arith.constant 0 : i32
    return %arg0, %c0_i32 : i32, i32
  }
}

</mosaic_0001>

<llo_original>
// kernel: ndvi_forward.1
$region0: #{ndvi_forward.1}
  #allocation0 [shape = 'u32[]', space=smem, size = 0x4, offset = 0x4, fixed_abs, tag = 'smem constant byte address 0x4 - core index']
  #allocation1 [shape = 'u32[144,128]{1,0:T(1,128)}', space=vmem, size = 0x12000, scoped, tag = 'internal scratch']
  #allocation2 [shape = 'f32[32,256]{1,0:T(8,128)}', space=vmem, size = 0x8000, scoped, tag = 'scratch operand']
  #allocation3 [shape = 'f32[1]{0:T(128)S(6)}', space=smem, size = 0x200, scoped, tag = 'scoped memory for ndvi_forward.1']
  #allocation4 [shape = 'f32[1]{0:T(128)S(6)}', space=smem, size = 0x200, scoped, tag = 'scoped memory for ndvi_forward.1']
  %s0 = inlined_call_operand.hbm [shape: f32[2,1,256,256], index: 0, kind: input, shape index: {}]
  %s1 = inlined_call_operand.vmem [shape: f32[16], index: 1, kind: input, shape index: {}]
  %s2 = inlined_call_operand.<no memory space> [shape: f32[1], index: 2, kind: input, shape index: {}]
  %s3 = inlined_call_operand.vmem [shape: f32[32,256], index: 3, kind: input, shape index: {}]
  %s4 = inlined_call_operand.<no memory space> [shape: f32[1], index: 4, kind: input, shape index: {}]
  %s5 = inlined_call_operand.vmem [shape: f32[2,128], index: 5, kind: output, shape index: {}]
  %s6 = sld [smem:[#allocation0]]
  $region52: #{ndvi_forward.1} parent=0
    _
  %s8 = ssub.s32 1, %s6
  %s9 = scalar_select 0, %s8, %s6
  %10 = sst [smem:[#allocation3]] %s2
  %11 = sst [smem:[#allocation4]] %s4
  $region1: #{ndvi_forward.1} parent=0
    #allocation5 [shape = 'u8[524288]{0}', space=vmem, size = 0x80000, scoped, tag = 'input window, operand 0, single buffered']
    #allocation6 [shape = 's32[1]{0}', space=sflag, size = 0x4, scoped, tag = 'scoped memory for ndvi_forward.1']
    #allocation7 [shape = 's32[1]{0}', space=sflag, size = 0x4, scoped, tag = 'scoped memory for ndvi_forward.1']
    #allocation8 [shape = 'u8[512]{0}', space=smem, size = 0x200, scoped, tag = 'input window, operand 1, single buffered']
    %12 = vsyncpa [#allocation6], 0
    %13 = vsyncpa [#allocation7], 0
    // Predicated region
    $region2: #{ndvi_forward.1} parent=1 // pred_check
      _
    $region3: #{ndvi_forward.1} parent=1 // pred_check_branch
      %15 = sbr.rel (0) target = $region5
    $region4: #{ndvi_forward.1} parent=1 // pred_region
      %s17 = ssub.s32 16384, 16384
      %18 = vsyncadd [#allocation6], %s17
      %s19 = sshll.u32 [#allocation5], 4
      %s20 = int_to_ptr.vmem [resolvable:$true] %s19
      %25 = dma.hbm_to_vmem [thread:$0]  %s0, 16384, %s20, [#allocation6], 256, 256, 16
    $region5: #{ndvi_forward.1} parent=1 // pred_fallthru
      _
    // Predicated region
    $region6: #{ndvi_forward.1} parent=1 // pred_check
      _
    $region7: #{ndvi_forward.1} parent=1 // pred_check_branch
      %27 = sbr.rel (0) target = $region9
    $region8: #{ndvi_forward.1} parent=1 // pred_region
      %s29 = ssub.s32 16, 16
      %30 = vsyncadd [#allocation7], %s29
      %s32 = sshll.u32 %s1, 4
      %s33 = int_to_ptr.vmem [resolvable:$true] %s32
      %35 = dma.vmem_to_smem %s33, 16, [#allocation8], [#allocation7]
    $region9: #{ndvi_forward.1} parent=1 // pred_fallthru
      _
    // Predicated region
    $region10: #{ndvi_forward.1} parent=1 // pred_check
      _
    $region11: #{ndvi_forward.1} parent=1 // pred_check_branch
      %37 = sbr.rel (0) target = $region13
    $region12: #{ndvi_forward.1} parent=1 // pred_region
      _
    $region13: #{ndvi_forward.1} parent=1 // pred_fallthru
      _
    // Predicated region
    $region14: #{ndvi_forward.1} parent=1 // pred_check
      _
    $region15: #{ndvi_forward.1} parent=1 // pred_check_branch
      %39 = sbr.rel (0) target = $region17
    $region16: #{ndvi_forward.1} parent=1 // pred_region
      _
    $region17: #{ndvi_forward.1} parent=1 // pred_fallthru
      _
    // Predicated region
    $region18: #{ndvi_forward.1} parent=1 // pred_check
      _
    $region19: #{ndvi_forward.1} parent=1 // pred_check_branch
      %41 = sbr.rel (0) target = $region21
    $region20: #{ndvi_forward.1} parent=1 // pred_region
      _
    $region21: #{ndvi_forward.1} parent=1 // pred_fallthru
      _
    // Predicated region
    $region22: #{ndvi_forward.1} parent=1 // pred_check
      _
    $region23: #{ndvi_forward.1} parent=1 // pred_check_branch
      %43 = sbr.rel (0) target = $region25
    $region24: #{ndvi_forward.1} parent=1 // pred_region
      %44 = dma.done [#allocation6], 16384
    $region25: #{ndvi_forward.1} parent=1 // pred_fallthru
      _
    // Predicated region
    $region26: #{ndvi_forward.1} parent=1 // pred_check
      _
    $region27: #{ndvi_forward.1} parent=1 // pred_check_branch
      %46 = sbr.rel (0) target = $region29
    $region28: #{ndvi_forward.1} parent=1 // pred_region
      %47 = dma.done [#allocation7], 16
    $region29: #{ndvi_forward.1} parent=1 // pred_fallthru
      _
    %48 = sfence
    %s49 = sld [smem:[#allocation8]]
    %s50 = sld [smem:[#allocation8 + $0x1]]
    %s51 = sld [smem:[#allocation8 + $0x2]]
    %s52 = sld [smem:[#allocation8 + $0x3]]
    %s53 = sld [smem:[#allocation8 + $0x4]]
    %s54 = sld [smem:[#allocation8 + $0x5]]
    %s55 = sld [smem:[#allocation8 + $0x6]]
    %s56 = sld [smem:[#allocation8 + $0x7]]
    %s57 = sld [smem:[#allocation8 + $0x8]]
    %s58 = sld [smem:[#allocation8 + $0x9]]
    %s59 = sld [smem:[#allocation8 + $0xa]]
    %s60 = sld [smem:[#allocation8 + $0xb]]
    %s61 = sld [smem:[#allocation8 + $0xc]]
    %s62 = sld [smem:[#allocation8 + $0xd]]
    %s63 = sld [smem:[#allocation8 + $0xe]]
    %s64 = sld [smem:[#allocation8 + $0xf]]
    %s65 = sld [smem:[#allocation3]]
    %s66 = sld [smem:[#allocation4]]
    %67 = vst [vmem:[#allocation2] sm:$0xff] 0.0
    %68 = vst [vmem:[#allocation2 + $0x8] sm:$0xff] 0.0
    %69 = vst [vmem:[#allocation2 + $0x10] sm:$0xff] 0.0
    %70 = vst [vmem:[#allocation2 + $0x18] sm:$0xff] 0.0
    %71 = vst [vmem:[#allocation2 + $0x20] sm:$0xff] 0.0
    %72 = vst [vmem:[#allocation2 + $0x28] sm:$0xff] 0.0
    %73 = vst [vmem:[#allocation2 + $0x30] sm:$0xff] 0.0
    %74 = vst [vmem:[#allocation2 + $0x38] sm:$0xff] 0.0
    loop: start=0, step=1, limit=2
    $region30: #{ndvi_forward.1} parent=1 // loop_pre_header
      _
    $region31: #{ndvi_forward.1} parent=1 // loop_header
      %s76 = sphi 0, %s80
      %p77 = scmp.ge.s32.totalorder %s76, 2
    $region32: #{ndvi_forward.1} parent=1 // loop_header_branch
      %79 = sbr.rel (%p77) target = $region36
    $region33: #{ndvi_forward.1} parent=1 // loop_body
      loop: start=0, step=1, limit=31
      $region37: #{ndvi_forward.1} parent=33 // loop_pre_header
        _
      $region38: #{ndvi_forward.1} parent=33 // loop_header
        %s82 = sphi 0, %s86
        %p83 = scmp.ge.s32.totalorder %s82, 31
      $region39: #{ndvi_forward.1} parent=33 // loop_header_branch
        %85 = sbr.rel (%p83) target = $region43
      $region40: #{ndvi_forward.1} parent=33 // loop_body
        %s87 = smul.u32 %s82, 8
        %s88 = sshra.s32 %s87, 3
        %s89 = sand.u32 %s87, 7
        %s90 = smul.u32 %s88, 2
        %s91 = smul.u32 %s76, 64
        %s92 = sadd.s32 %s90, %s91
        %s93 = smul.addr %s92, 8
        %s94 = scalar_lea.vmem [#allocation5], %s93
        %v95 = vld [vmem:[%s94] sm:$0xff]
        %v96 = vld [vmem:[%s94 + $0x8] sm:$0xff]
        %v97 = vld [vmem:[%s94 + $0x10] sm:$0xff]
        %v98 = vld [vmem:[%s94 + $0x18] sm:$0xff]
        %v99 = vstv %s49
        %v100 = vmul.f32 %v95, %v99
        %v101 = vmul.f32 %v96, %v99
        %v102 = vadd.f32 %v100, 0.0
        %v103 = vadd.f32 %v101, 0.0
        %104 = vrot.lane.b32.xlu0 %v95, 127
        %v105 = vpop.permute.xlu0 %104
        %106 = vrot.lane.b32.xlu0 %v96, 127
        %v107 = vpop.permute.xlu0 %106
        %v108 = vlaneseq
        %v109 = vand.u32 %v108, 127
        %vm110 = vcmp.lt.s32.totalorder %v109, 127
        %v111 = vsel %vm110, %v105, %v107
        %v112 = vsel %vm110, %v107, %v105
        %v113 = vstv %s50
        %v114 = vmul.f32 %v111, %v113
        %v115 = vmul.f32 %v112, %v113
        %v116 = vadd.f32 %v102, %v114
        %v117 = vadd.f32 %v103, %v115
        %118 = vrot.lane.b32.xlu0 %v95, 126
        %v119 = vpop.permute.xlu0 %118
        %120 = vrot.lane.b32.xlu0 %v96, 126
        %v121 = vpop.permute.xlu0 %120
        %vm122 = vcmp.lt.s32.totalorder %v109, 126
        %v123 = vsel %vm122, %v119, %v121
        %v124 = vsel %vm122, %v121, %v119
        %v125 = vstv %s51
        %v126 = vmul.f32 %v123, %v125
        %v127 = vmul.f32 %v124, %v125
        %v128 = vadd.f32 %v116, %v126
        %v129 = vadd.f32 %v117, %v127
        %130 = vrot.lane.b32.xlu0 %v95, 125
        %v131 = vpop.permute.xlu0 %130
        %132 = vrot.lane.b32.xlu0 %v96, 125
        %v133 = vpop.permute.xlu0 %132
        %vm134 = vcmp.lt.s32.totalorder %v109, 125
        %v135 = vsel %vm134, %v131, %v133
        %v136 = vsel %vm134, %v133, %v131
        %v137 = vstv %s52
        %v138 = vmul.f32 %v135, %v137
        %v139 = vmul.f32 %v136, %v137
        %v140 = vadd.f32 %v128, %v138
        %v141 = vadd.f32 %v129, %v139
        %v142 = vstv %s53
        %v143 = vmul.f32 %v95, %v142
        %v144 = vmul.f32 %v96, %v142
        %v145 = vmul.f32 %v97, %v142
        %v146 = vmul.f32 %v98, %v142
        %vm151 = vcmask 1046528
        %v152 = vrot.slane %v143, 1
        %v153 = vrot.slane %v145, 1
        %v154 = vsel %vm151, %v152, %v153
        %v155 = vrot.slane %v144, 1
        %v156 = vrot.slane %v146, 1
        %v157 = vsel %vm151, %v155, %v156
        %v160 = vadd.f32 %v140, %v154
        %v161 = vadd.f32 %v141, %v157
        %v166 = vrot.slane %v95, 1
        %v167 = vrot.slane %v97, 1
        %v168 = vsel %vm151, %v166, %v167
        %v169 = vrot.slane %v96, 1
        %v170 = vrot.slane %v98, 1
        %v171 = vsel %vm151, %v169, %v170
        %174 = vrot.lane.b32.xlu0 %v168, 127
        %v175 = vpop.permute.xlu0 %174
        %176 = vrot.lane.b32.xlu0 %v171, 127
        %v177 = vpop.permute.xlu0 %176
        %v178 = vsel %vm110, %v175, %v177
        %v179 = vsel %vm110, %v177, %v175
        %v180 = vstv %s54
        %v181 = vmul.f32 %v178, %v180
        %v182 = vmul.f32 %v179, %v180
        %v183 = vadd.f32 %v160, %v181
        %v184 = vadd.f32 %v161, %v182
        %185 = vrot.lane.b32.xlu0 %v168, 126
        %v186 = vpop.permute.xlu0 %185
        %187 = vrot.lane.b32.xlu0 %v171, 126
        %v188 = vpop.permute.xlu0 %187
        %v189 = vsel %vm122, %v186, %v188
        %v190 = vsel %vm122, %v188, %v186
        %v191 = vstv %s55
        %v192 = vmul.f32 %v189, %v191
        %v193 = vmul.f32 %v190, %v191
        %v194 = vadd.f32 %v183, %v192
        %v195 = vadd.f32 %v184, %v193
        %196 = vrot.lane.b32.xlu0 %v168, 125
        %v197 = vpop.permute.xlu0 %196
        %198 = vrot.lane.b32.xlu0 %v171, 125
        %v199 = vpop.permute.xlu0 %198
        %v200 = vsel %vm134, %v197, %v199
        %v201 = vsel %vm134, %v199, %v197
        %v202 = vstv %s56
        %v203 = vmul.f32 %v200, %v202
        %v204 = vmul.f32 %v201, %v202
        %v205 = vadd.f32 %v194, %v203
        %v206 = vadd.f32 %v195, %v204
        %v207 = vstv %s57
        %v208 = vmul.f32 %v95, %v207
        %v209 = vmul.f32 %v96, %v207
        %v210 = vmul.f32 %v97, %v207
        %v211 = vmul.f32 %v98, %v207
        %vm216 = vcmask 1045504
        %v217 = vrot.slane %v208, 2
        %v218 = vrot.slane %v210, 2
        %v219 = vsel %vm216, %v217, %v218
        %v220 = vrot.slane %v209, 2
        %v221 = vrot.slane %v211, 2
        %v222 = vsel %vm216, %v220, %v221
        %v225 = vadd.f32 %v205, %v219
        %v226 = vadd.f32 %v206, %v222
        %v227 = vrot.slane %v95, 2
        %v228 = vrot.slane %v97, 2
        %v229 = vsel %vm216, %v227, %v228
        %v230 = vrot.slane %v96, 2
        %v231 = vrot.slane %v98, 2
        %v232 = vsel %vm216, %v230, %v231
        %235 = vrot.lane.b32.xlu0 %v229, 127
        %v236 = vpop.permute.xlu0 %235
        %237 = vrot.lane.b32.xlu0 %v232, 127
        %v238 = vpop.permute.xlu0 %237
        %v239 = vsel %vm110, %v236, %v238
        %v240 = vsel %vm110, %v238, %v236
        %v241 = vstv %s58
        %v242 = vmul.f32 %v239, %v241
        %v243 = vmul.f32 %v240, %v241
        %v244 = vadd.f32 %v225, %v242
        %v245 = vadd.f32 %v226, %v243
        %246 = vrot.lane.b32.xlu0 %v229, 126
        %v247 = vpop.permute.xlu0 %246
        %248 = vrot.lane.b32.xlu0 %v232, 126
        %v249 = vpop.permute.xlu0 %248
        %v250 = vsel %vm122, %v247, %v249
        %v251 = vsel %vm122, %v249, %v247
        %v252 = vstv %s59
        %v253 = vmul.f32 %v250, %v252
        %v254 = vmul.f32 %v251, %v252
        %v255 = vadd.f32 %v244, %v253
        %v256 = vadd.f32 %v245, %v254
        %257 = vrot.lane.b32.xlu0 %v229, 125
        %v258 = vpop.permute.xlu0 %257
        %259 = vrot.lane.b32.xlu0 %v232, 125
        %v260 = vpop.permute.xlu0 %259
        %v261 = vsel %vm134, %v258, %v260
        %v262 = vsel %vm134, %v260, %v258
        %v263 = vstv %s60
        %v264 = vmul.f32 %v261, %v263
        %v265 = vmul.f32 %v262, %v263
        %v266 = vadd.f32 %v255, %v264
        %v267 = vadd.f32 %v256, %v265
        %v268 = vstv %s61
        %v269 = vmul.f32 %v95, %v268
        %v270 = vmul.f32 %v96, %v268
        %v271 = vmul.f32 %v97, %v268
        %v272 = vmul.f32 %v98, %v268
        %vm277 = vcmask 1044480
        %v278 = vrot.slane %v269, 3
        %v279 = vrot.slane %v271, 3
        %v280 = vsel %vm277, %v278, %v279
        %v281 = vrot.slane %v270, 3
        %v282 = vrot.slane %v272, 3
        %v283 = vsel %vm277, %v281, %v282
        %v286 = vadd.f32 %v266, %v280
        %v287 = vadd.f32 %v267, %v283
        %v288 = vrot.slane %v95, 3
        %v289 = vrot.slane %v97, 3
        %v290 = vsel %vm277, %v288, %v289
        %v291 = vrot.slane %v96, 3
        %v292 = vrot.slane %v98, 3
        %v293 = vsel %vm277, %v291, %v292
        %296 = vrot.lane.b32.xlu0 %v290, 127
        %v297 = vpop.permute.xlu0 %296
        %298 = vrot.lane.b32.xlu0 %v293, 127
        %v299 = vpop.permute.xlu0 %298
        %v300 = vsel %vm110, %v297, %v299
        %v301 = vsel %vm110, %v299, %v297
        %v302 = vstv %s62
        %v303 = vmul.f32 %v300, %v302
        %v304 = vmul.f32 %v301, %v302
        %v305 = vadd.f32 %v286, %v303
        %v306 = vadd.f32 %v287, %v304
        %307 = vrot.lane.b32.xlu0 %v290, 126
        %v308 = vpop.permute.xlu0 %307
        %309 = vrot.lane.b32.xlu0 %v293, 126
        %v310 = vpop.permute.xlu0 %309
        %v311 = vsel %vm122, %v308, %v310
        %v312 = vsel %vm122, %v310, %v308
        %v313 = vstv %s63
        %v314 = vmul.f32 %v311, %v313
        %v315 = vmul.f32 %v312, %v313
        %v316 = vadd.f32 %v305, %v314
        %v317 = vadd.f32 %v306, %v315
        %318 = vrot.lane.b32.xlu0 %v290, 125
        %v319 = vpop.permute.xlu0 %318
        %320 = vrot.lane.b32.xlu0 %v293, 125
        %v321 = vpop.permute.xlu0 %320
        %v322 = vsel %vm134, %v319, %v321
        %v323 = vsel %vm134, %v321, %v319
        %v324 = vstv %s64
        %v325 = vmul.f32 %v322, %v324
        %v326 = vmul.f32 %v323, %v324
        %v327 = vadd.f32 %v316, %v325
        %v328 = vadd.f32 %v317, %v326
        %v329 = vrot.slane %v327, 4
        %v330 = vmax.f32 %v327, %v329
        %v331 = vrot.slane %v330, 2
        %v332 = vmax.f32 %v330, %v331
        %v333 = vrot.slane %v332, 1
        %v334 = vmax.f32 %v332, %v333
        %v335 = vrot.slane %v328, 4
        %v336 = vmax.f32 %v328, %v335
        %v337 = vrot.slane %v336, 2
        %v338 = vmax.f32 %v336, %v337
        %v339 = vrot.slane %v338, 1
        %v340 = vmax.f32 %v338, %v339
        %v341 = vstv %s65
        %v342 = vadd.f32 %v334, %v341
        %v343 = vadd.f32 %v340, %v341
        %v346 = vcombine.low %v342, %v343
        %v348 = vunpack.c.l.s4 1966171168
        %v349 = vunpack.c.0.s8 %v348
        %v350 = vlaneseq
        %v351 = vshrl.u32 %v350, 7
        %v352 = vsub.s32 %v349, %v351
        %v353 = vrot.slane %v346, %v352
        %v355 = vunpack.c.l.s4 1966171168
        %v356 = vunpack.c.0.s8 %v355
        %v357 = vlaneseq
        %v358 = vshrl.u32 %v357, 7
        %v359 = vsub.s32 %v356, %v358
        %v360 = vrot.slane %v353, %v359
        %v362 = vlaneseq
        %vm363 = vcmp.ge.s32.totalorder %v362, 0
        %vm364 = vcmp.lt.s32.totalorder %v362, 256
        %vm365 = vmand %vm363, %vm364
        %s366 = sshra.s32 %s82, 3
        %s367 = sand.u32 %s82, 7
        %s368 = sshra.s32 %s82, 3
        %s369 = sand.u32 %s82, 7
        %s370 = smul.u32 %s366, 2
        %s371 = smul.u32 %s370, 8
        %s372 = sadd.s32 %s371, %s369
        %s373 = scalar_lea.vmem [#allocation2], %s372
        %374 = vst.msk [vmem:[%s373] ss:$8 sm:$0x3] %vm365, %v360
        %375 = vst.msk [vmem:[%s373] ss:$8 sm:$0x0] %vm365, %v360
      $region41: #{ndvi_forward.1} parent=33 // loop_footer
        %s86 = sadd.s32 1, %s82
      $region42: #{ndvi_forward.1} parent=33 // loop_footer_branch
        %81 = sbr.rel target = $region38
      $region43: #{ndvi_forward.1} parent=33 // loop_exit
        _
      %v376 = vld [vmem:[#allocation2] sm:$0xff]
      %v377 = vld [vmem:[#allocation2 + $0x8] sm:$0xff]
      %v378 = vld [vmem:[#allocation2 + $0x10] sm:$0xff]
      %v379 = vld [vmem:[#allocation2 + $0x18] sm:$0xff]
      %v380 = vld [vmem:[#allocation2 + $0x20] sm:$0xff]
      %v381 = vld [vmem:[#allocation2 + $0x28] sm:$0xff]
      %v382 = vld [vmem:[#allocation2 + $0x30] sm:$0xff]
      %v383 = vld [vmem:[#allocation2 + $0x38] sm:$0xff]
      %384 = vrot.lane.b32.xlu0 %v376, 127
      %v385 = vpop.permute.xlu0 %384
      %386 = vrot.lane.b32.xlu0 %v378, 127
      %v387 = vpop.permute.xlu0 %386
      %388 = vrot.lane.b32.xlu0 %v380, 127
      %v389 = vpop.permute.xlu0 %388
      %390 = vrot.lane.b32.xlu0 %v382, 127
      %v391 = vpop.permute.xlu0 %390
      %392 = vrot.lane.b32.xlu0 %v377, 127
      %v393 = vpop.permute.xlu0 %392
      %394 = vrot.lane.b32.xlu0 %v379, 127
      %v395 = vpop.permute.xlu0 %394
      %396 = vrot.lane.b32.xlu0 %v381, 127
      %v397 = vpop.permute.xlu0 %396
      %398 = vrot.lane.b32.xlu0 %v383, 127
      %v399 = vpop.permute.xlu0 %398
      %v400 = vlaneseq
      %v401 = vand.u32 %v400, 127
      %vm402 = vcmp.lt.s32.totalorder %v401, 127
      %v403 = vsel %vm402, %v385, %v393
      %v404 = vsel %vm402, %v387, %v395
      %v405 = vsel %vm402, %v389, %v397
      %v406 = vsel %vm402, %v391, %v399
      %v407 = vsel %vm402, %v393, %v385
      %v408 = vsel %vm402, %v395, %v387
      %v409 = vsel %vm402, %v397, %v389
      %v410 = vsel %vm402, %v399, %v391
      %v411 = vmax.f32 %v376, %v403
      %v412 = vmax.f32 %v377, %v407
      %v413 = vmax.f32 %v378, %v404
      %v414 = vmax.f32 %v379, %v408
      %v415 = vmax.f32 %v380, %v405
      %v416 = vmax.f32 %v381, %v409
      %v417 = vmax.f32 %v382, %v406
      %v418 = vmax.f32 %v383, %v410
      %419 = vrot.lane.b32.xlu0 %v411, 126
      %v420 = vpop.permute.xlu0 %419
      %421 = vrot.lane.b32.xlu0 %v413, 126
      %v422 = vpop.permute.xlu0 %421
      %423 = vrot.lane.b32.xlu0 %v415, 126
      %v424 = vpop.permute.xlu0 %423
      %425 = vrot.lane.b32.xlu0 %v417, 126
      %v426 = vpop.permute.xlu0 %425
      %427 = vrot.lane.b32.xlu0 %v412, 126
      %v428 = vpop.permute.xlu0 %427
      %429 = vrot.lane.b32.xlu0 %v414, 126
      %v430 = vpop.permute.xlu0 %429
      %431 = vrot.lane.b32.xlu0 %v416, 126
      %v432 = vpop.permute.xlu0 %431
      %433 = vrot.lane.b32.xlu0 %v418, 126
      %v434 = vpop.permute.xlu0 %433
      %vm435 = vcmp.lt.s32.totalorder %v401, 126
      %v436 = vsel %vm435, %v420, %v428
      %v437 = vsel %vm435, %v422, %v430
      %v438 = vsel %vm435, %v424, %v432
      %v439 = vsel %vm435, %v426, %v434
      %v440 = vsel %vm435, %v428, %v420
      %v441 = vsel %vm435, %v430, %v422
      %v442 = vsel %vm435, %v432, %v424
      %v443 = vsel %vm435, %v434, %v426
      %v444 = vmax.f32 %v411, %v436
      %v445 = vmax.f32 %v412, %v440
      %v446 = vmax.f32 %v413, %v437
      %v447 = vmax.f32 %v414, %v441
      %v448 = vmax.f32 %v415, %v438
      %v449 = vmax.f32 %v416, %v442
      %v450 = vmax.f32 %v417, %v439
      %v451 = vmax.f32 %v418, %v443
      %452 = vrot.lane.b32.xlu0 %v444, 124
      %v453 = vpop.permute.xlu0 %452
      %454 = vrot.lane.b32.xlu0 %v446, 124
      %v455 = vpop.permute.xlu0 %454
      %456 = vrot.lane.b32.xlu0 %v448, 124
      %v457 = vpop.permute.xlu0 %456
      %458 = vrot.lane.b32.xlu0 %v450, 124
      %v459 = vpop.permute.xlu0 %458
      %460 = vrot.lane.b32.xlu0 %v445, 124
      %v461 = vpop.permute.xlu0 %460
      %462 = vrot.lane.b32.xlu0 %v447, 124
      %v463 = vpop.permute.xlu0 %462
      %464 = vrot.lane.b32.xlu0 %v449, 124
      %v465 = vpop.permute.xlu0 %464
      %466 = vrot.lane.b32.xlu0 %v451, 124
      %v467 = vpop.permute.xlu0 %466
      %vm468 = vcmp.lt.s32.totalorder %v401, 124
      %v469 = vsel %vm468, %v453, %v461
      %v470 = vsel %vm468, %v455, %v463
      %v471 = vsel %vm468, %v457, %v465
      %v472 = vsel %vm468, %v459, %v467
      %v473 = vsel %vm468, %v461, %v453
      %v474 = vsel %vm468, %v463, %v455
      %v475 = vsel %vm468, %v465, %v457
      %v476 = vsel %vm468, %v467, %v459
      %v477 = vmax.f32 %v444, %v469
      %v478 = vmax.f32 %v445, %v473
      %v479 = vmax.f32 %v446, %v470
      %v480 = vmax.f32 %v447, %v474
      %v481 = vmax.f32 %v448, %v471
      %v482 = vmax.f32 %v449, %v475
      %v483 = vmax.f32 %v450, %v472
      %v484 = vmax.f32 %v451, %v476
      %v485 = vld [vmem:[%s3] sm:$0xff]
      %v486 = vld [vmem:[%s3 + $0x8] sm:$0xff]
      %v487 = vld [vmem:[%s3 + $0x10] sm:$0xff]
      %v488 = vld [vmem:[%s3 + $0x18] sm:$0xff]
      %v489 = vld [vmem:[%s3 + $0x20] sm:$0xff]
      %v490 = vld [vmem:[%s3 + $0x28] sm:$0xff]
      %v491 = vld [vmem:[%s3 + $0x30] sm:$0xff]
      %v492 = vld [vmem:[%s3 + $0x38] sm:$0xff]
      %v493 = vmul.f32 %v477, %v485
      %v494 = vmul.f32 %v478, %v486
      %v495 = vmul.f32 %v479, %v487
      %v496 = vmul.f32 %v480, %v488
      %v497 = vmul.f32 %v481, %v489
      %v498 = vmul.f32 %v482, %v490
      %v499 = vmul.f32 %v483, %v491
      %v500 = vmul.f32 %v484, %v492
      %v501 = vadd.f32 %v493, %v494
      %v502 = vadd.f32 %v501, %v495
      %v503 = vadd.f32 %v502, %v496
      %v504 = vadd.f32 %v503, %v497
      %v505 = vadd.f32 %v504, %v498
      %v506 = vadd.f32 %v505, %v499
      %v507 = vadd.f32 %v506, %v500
      %508 = vadd.xlane.f32.xlu0 %v507
      %v509 = vpop.xlane.xlu0 %508
      %v510 = vrot.slane %v509, 4
      %v511 = vadd.f32 %v509, %v510
      %v512 = vrot.slane %v511, 2
      %v513 = vadd.f32 %v511, %v512
      %v514 = vrot.slane %v513, 1
      %v515 = vadd.f32 %v513, %v514
      %s516 = vtos %v515
      %v517 = vstv %s516
      %v518 = vstv %s66
      %v519 = vadd.f32 %v517, %v518
      %s520 = scalar_lea.vmem %s5, %s76
      %521 = vst [vmem:[%s520] sm:$0x1] %v519
    $region34: #{ndvi_forward.1} parent=1 // loop_footer
      %s80 = sadd.s32 1, %s76
    $region35: #{ndvi_forward.1} parent=1 // loop_footer_branch
      %75 = sbr.rel target = $region31
    $region36: #{ndvi_forward.1} parent=1 // loop_exit
      _
    // Predicated region
    $region44: #{ndvi_forward.1} parent=1 // pred_check
      _
    $region45: #{ndvi_forward.1} parent=1 // pred_check_branch
      %523 = sbr.rel (0) target = $region47
    $region46: #{ndvi_forward.1} parent=1 // pred_region
      _
    $region47: #{ndvi_forward.1} parent=1 // pred_fallthru
      _
    // Predicated region
    $region48: #{ndvi_forward.1} parent=1 // pred_check
      _
    $region49: #{ndvi_forward.1} parent=1 // pred_check_branch
      %525 = sbr.rel (0) target = $region51
    $region50: #{ndvi_forward.1} parent=1 // pred_region
      _
    $region51: #{ndvi_forward.1} parent=1 // pred_fallthru
      _
    %526 = vsyncpa [#allocation6], 1
    %527 = vsyncpa [#allocation7], 1

</llo_original>
